<compile_context>
chip_gen: v7x
topology: tpu7x:2x2x1
jax: 0.10.0
libtpu: 0.0.40
codegen_flags: <defaults>
</compile_context>

<pallas_src>
import numpy as np
import jax
import jax.numpy as jnp
from jax.experimental import pallas as pl
from jax.experimental.pallas import tpu as pltpu

KSIZE = 7
SIGMA = 3.0


# ---------------------------------------------------------------------------
# Weight init (deterministic, matches GaussianSmoothing.weights_init):
# scipy.ndimage.gaussian_filter of a centered delta, mode='reflect', truncate=4.
# Because the delta is rank-1 and the filter is separable, the 2D weight is
# exactly outer(taps, taps) for the 1D effective taps computed below.
# ---------------------------------------------------------------------------
def make_taps(size=KSIZE, sigma=SIGMA, truncate=4.0):
    radius = int(truncate * float(sigma) + 0.5)
    xs = np.arange(-radius, radius + 1, dtype=np.float64)
    w1d = np.exp(-0.5 * (xs / sigma) ** 2)
    w1d /= w1d.sum()
    d = np.zeros(size, np.float64)
    d[size // 2] = 1.0
    dp = np.pad(d, radius, mode="symmetric")       # == scipy 'reflect'
    return np.correlate(dp, w1d, mode="valid")     # (size,) float64


def _gaussian_filter_delta(size, sigma, truncate=4.0):
    """2D scipy-equivalent weight (used only by the numpy reference in __main__)."""
    radius = int(truncate * float(sigma) + 0.5)
    x = np.arange(-radius, radius + 1, dtype=np.float64)
    w1d = np.exp(-0.5 * (x / sigma) ** 2)
    w1d /= w1d.sum()
    out = np.zeros((size, size), dtype=np.float64)
    out[size // 2, size // 2] = 1.0
    for axis in (0, 1):
        pad = [(0, 0), (0, 0)]
        pad[axis] = (radius, radius)
        padded = np.pad(out, pad, mode="symmetric")
        out = np.apply_along_axis(
            lambda m: np.correlate(m, w1d, mode="valid"), axis, padded)
    return out.astype(np.float32)


# ---------------------------------------------------------------------------
# Pallas kernel: one (n, c) plane per grid step.
#   x_ref: (1, 1, H, W)   unpadded input plane (W on lanes, H on sublanes)
#   o_ref: (1, 1, H-2, W-2)
# Reflect padding is built in-kernel with static slices + concat; the separable
# 7-tap filter is applied horizontally (lane-offset slices) then vertically
# (sublane-offset slices), accumulating in f32.
# ---------------------------------------------------------------------------
def _make_smooth_kernel(taps, h, w):
    k = len(taps)
    ho, wo = h - 2, w - 2

    def kernel(x_ref, o_ref):
        x = x_ref[0, 0]                                           # (H, W) f32

        # Reflect-pad width by 2: cols [2, 1] | x | [W-2, W-3].
        xw = jnp.concatenate(
            [x[:, 2:3], x[:, 1:2], x, x[:, w - 2:w - 1], x[:, w - 3:w - 2]],
            axis=1)                                               # (H, W+4)

        # Horizontal 7-tap pass (static lane-offset slices, scalar taps).
        t = taps[0] * xw[:, 0:wo]
        for kk in range(1, k):
            t = t + taps[kk] * xw[:, kk:kk + wo]                  # (H, Wo)

        # Reflect-pad height by 2: rows [2, 1] | t | [H-2, H-3].
        th = jnp.concatenate(
            [t[2:3, :], t[1:2, :], t, t[h - 2:h - 1, :], t[h - 3:h - 2, :]],
            axis=0)                                               # (H+4, Wo)

        # Vertical 7-tap pass (static sublane-offset slices).
        acc = taps[0] * th[0:ho, :]
        for kk in range(1, k):
            acc = acc + taps[kk] * th[kk:kk + ho, :]              # (Ho, Wo)

        o_ref[0, 0] = acc.astype(o_ref.dtype)

    return kernel


def gaussian_smoothing(x, taps):
    """x: (N, C, H, W) f32; taps: (7,) 1D Gaussian taps -> (N, C, H-2, W-2) f32."""
    n, c, h, w = x.shape
    ho, wo = h - 2, w - 2
    kernel = _make_smooth_kernel(tuple(float(t) for t in np.asarray(taps)), h, w)

    return pl.pallas_call(
        kernel,
        out_shape=jax.ShapeDtypeStruct((n, c, ho, wo), x.dtype),
        grid=(n, c),
        in_specs=[pl.BlockSpec((1, 1, h, w), lambda i, j: (i, j, 0, 0))],
        out_specs=pl.BlockSpec((1, 1, ho, wo), lambda i, j: (i, j, 0, 0)),
        compiler_params=pltpu.CompilerParams(
            dimension_semantics=("parallel", "parallel"),
            vmem_limit_bytes=32 * 1024 * 1024,
        ),
    )(x)


if __name__ == "__main__":
    N, C, H, W = 2, 4, 16, 16
    key = jax.random.PRNGKey(0)
    x = jax.random.normal(key, (N, C, H, W), dtype=jnp.float32)

    taps = make_taps()                                   # (7,) float64
    k2d = _gaussian_filter_delta(KSIZE, SIGMA)           # (7, 7) float32 (scipy-equivalent)
    # Sanity: module's 2D weight is the outer product of the 1D taps.
    assert np.allclose(np.outer(taps, taps), k2d, rtol=1e-5, atol=1e-6)

    y = gaussian_smoothing(x, taps)
    y = jax.block_until_ready(y)

    # Pure-numpy reference: reflect pad + valid depthwise 49-tap conv with the 2D weight.
    x_np = np.asarray(x)
    xp_np = np.pad(x_np, ((0, 0), (0, 0), (2, 2), (2, 2)), mode="reflect")
    Ho, Wo = H - 2, W - 2
    ref = np.zeros((N, C, Ho, Wo), np.float32)
    for i in range(KSIZE):
        for j in range(KSIZE):
            ref += xp_np[:, :, i:i + Ho, j:j + Wo] * k2d[i, j]

    assert y.shape == (N, C, Ho, Wo), y.shape
    np.testing.assert_allclose(np.asarray(y), ref, rtol=1e-5, atol=1e-5)
    print("KERNEL_OK")
</pallas_src>

<mosaic_0001>
module attributes {stable_mosaic.version = 11 : i64} {
  func.func @kernel(%arg0: i32, %arg1: i32, %arg2: memref<1x1x16x16xf32, #tpu.memory_space<vmem>>, %arg3: memref<1x1x14x14xf32, #tpu.memory_space<vmem>>) attributes {dimension_semantics = [#tpu.dimension_semantics<parallel>, #tpu.dimension_semantics<parallel>], iteration_bounds = array<i64: 2, 4>, scalar_prefetch = 0 : i64, scratch_operands = 0 : i64, tpu.core_type = #tpu.core_type<tc>, window_params = [{transform_indices = @transform_0, window_bounds = array<i64: 1, 1, 16, 16>}, {transform_indices = @transform_1, window_bounds = array<i64: 1, 1, 14, 14>}]} {
    %c0 = arith.constant 0 : index
    %c0_0 = arith.constant 0 : index
    %c0_1 = arith.constant 0 : index
    %c0_2 = arith.constant 0 : index
    %0 = vector.load %arg2[%c0, %c0_0, %c0_1, %c0_2] : memref<1x1x16x16xf32, #tpu.memory_space<vmem>>, vector<1x1x16x16xf32>
    %1 = vector.shape_cast %0 : vector<1x1x16x16xf32> to vector<16x16xf32>
    %2 = vector.extract_strided_slice %1 {offsets = [0, 2], sizes = [16, 1], strides = [1, 1]} : vector<16x16xf32> to vector<16x1xf32>
    %3 = vector.extract_strided_slice %1 {offsets = [0, 1], sizes = [16, 1], strides = [1, 1]} : vector<16x16xf32> to vector<16x1xf32>
    %4 = vector.extract_strided_slice %1 {offsets = [0, 14], sizes = [16, 1], strides = [1, 1]} : vector<16x16xf32> to vector<16x1xf32>
    %5 = vector.extract_strided_slice %1 {offsets = [0, 13], sizes = [16, 1], strides = [1, 1]} : vector<16x16xf32> to vector<16x1xf32>
    %6 = tpu.concatenate %2, %3, %1, %4, %5 in 1 : vector<16x1xf32>, vector<16x1xf32>, vector<16x16xf32>, vector<16x1xf32>, vector<16x1xf32> -> vector<16x20xf32>
    %7 = vector.extract_strided_slice %6 {offsets = [0, 0], sizes = [16, 14], strides = [1, 1]} : vector<16x20xf32> to vector<16x14xf32>
    %cst = arith.constant 0.136004984 : f32
    %8 = vector.broadcast %cst : f32 to vector<16x14xf32>
    %9 = arith.mulf %8, %7 : vector<16x14xf32>
    %10 = vector.extract_strided_slice %6 {offsets = [0, 1], sizes = [16, 14], strides = [1, 1]} : vector<16x20xf32> to vector<16x14xf32>
    %cst_3 = arith.constant 0.141167626 : f32
    %11 = vector.broadcast %cst_3 : f32 to vector<16x14xf32>
    %12 = arith.mulf %11, %10 : vector<16x14xf32>
    %13 = arith.addf %9, %12 : vector<16x14xf32>
    %14 = vector.extract_strided_slice %6 {offsets = [0, 2], sizes = [16, 14], strides = [1, 1]} : vector<16x20xf32> to vector<16x14xf32>
    %cst_4 = arith.constant 0.147594258 : f32
    %15 = vector.broadcast %cst_4 : f32 to vector<16x14xf32>
    %16 = arith.mulf %15, %14 : vector<16x14xf32>
    %17 = arith.addf %13, %16 : vector<16x14xf32>
    %18 = vector.extract_strided_slice %6 {offsets = [0, 3], sizes = [16, 14], strides = [1, 1]} : vector<16x20xf32> to vector<16x14xf32>
    %cst_5 = arith.constant 0.150466293 : f32
    %19 = vector.broadcast %cst_5 : f32 to vector<16x14xf32>
    %20 = arith.mulf %19, %18 : vector<16x14xf32>
    %21 = arith.addf %17, %20 : vector<16x14xf32>
    %22 = vector.extract_strided_slice %6 {offsets = [0, 4], sizes = [16, 14], strides = [1, 1]} : vector<16x20xf32> to vector<16x14xf32>
    %cst_6 = arith.constant 0.147594258 : f32
    %23 = vector.broadcast %cst_6 : f32 to vector<16x14xf32>
    %24 = arith.mulf %23, %22 : vector<16x14xf32>
    %25 = arith.addf %21, %24 : vector<16x14xf32>
    %26 = vector.extract_strided_slice %6 {offsets = [0, 5], sizes = [16, 14], strides = [1, 1]} : vector<16x20xf32> to vector<16x14xf32>
    %cst_7 = arith.constant 0.141167626 : f32
    %27 = vector.broadcast %cst_7 : f32 to vector<16x14xf32>
    %28 = arith.mulf %27, %26 : vector<16x14xf32>
    %29 = arith.addf %25, %28 : vector<16x14xf32>
    %30 = vector.extract_strided_slice %6 {offsets = [0, 6], sizes = [16, 14], strides = [1, 1]} : vector<16x20xf32> to vector<16x14xf32>
    %cst_8 = arith.constant 0.136004984 : f32
    %31 = vector.broadcast %cst_8 : f32 to vector<16x14xf32>
    %32 = arith.mulf %31, %30 : vector<16x14xf32>
    %33 = arith.addf %29, %32 : vector<16x14xf32>
    %34 = vector.extract_strided_slice %33 {offsets = [2, 0], sizes = [1, 14], strides = [1, 1]} : vector<16x14xf32> to vector<1x14xf32>
    %35 = vector.extract_strided_slice %33 {offsets = [1, 0], sizes = [1, 14], strides = [1, 1]} : vector<16x14xf32> to vector<1x14xf32>
    %36 = vector.extract_strided_slice %33 {offsets = [14, 0], sizes = [1, 14], strides = [1, 1]} : vector<16x14xf32> to vector<1x14xf32>
    %37 = vector.extract_strided_slice %33 {offsets = [13, 0], sizes = [1, 14], strides = [1, 1]} : vector<16x14xf32> to vector<1x14xf32>
    %38 = tpu.concatenate %34, %35, %33, %36, %37 in 0 : vector<1x14xf32>, vector<1x14xf32>, vector<16x14xf32>, vector<1x14xf32>, vector<1x14xf32> -> vector<20x14xf32>
    %39 = vector.extract_strided_slice %38 {offsets = [0, 0], sizes = [14, 14], strides = [1, 1]} : vector<20x14xf32> to vector<14x14xf32>
    %cst_9 = arith.constant 0.136004984 : f32
    %40 = vector.broadcast %cst_9 : f32 to vector<14x14xf32>
    %41 = arith.mulf %40, %39 : vector<14x14xf32>
    %42 = vector.extract_strided_slice %38 {offsets = [1, 0], sizes = [14, 14], strides = [1, 1]} : vector<20x14xf32> to vector<14x14xf32>
    %cst_10 = arith.constant 0.141167626 : f32
    %43 = vector.broadcast %cst_10 : f32 to vector<14x14xf32>
    %44 = arith.mulf %43, %42 : vector<14x14xf32>
    %45 = arith.addf %41, %44 : vector<14x14xf32>
    %46 = vector.extract_strided_slice %38 {offsets = [2, 0], sizes = [14, 14], strides = [1, 1]} : vector<20x14xf32> to vector<14x14xf32>
    %cst_11 = arith.constant 0.147594258 : f32
    %47 = vector.broadcast %cst_11 : f32 to vector<14x14xf32>
    %48 = arith.mulf %47, %46 : vector<14x14xf32>
    %49 = arith.addf %45, %48 : vector<14x14xf32>
    %50 = vector.extract_strided_slice %38 {offsets = [3, 0], sizes = [14, 14], strides = [1, 1]} : vector<20x14xf32> to vector<14x14xf32>
    %cst_12 = arith.constant 0.150466293 : f32
    %51 = vector.broadcast %cst_12 : f32 to vector<14x14xf32>
    %52 = arith.mulf %51, %50 : vector<14x14xf32>
    %53 = arith.addf %49, %52 : vector<14x14xf32>
    %54 = vector.extract_strided_slice %38 {offsets = [4, 0], sizes = [14, 14], strides = [1, 1]} : vector<20x14xf32> to vector<14x14xf32>
    %cst_13 = arith.constant 0.147594258 : f32
    %55 = vector.broadcast %cst_13 : f32 to vector<14x14xf32>
    %56 = arith.mulf %55, %54 : vector<14x14xf32>
    %57 = arith.addf %53, %56 : vector<14x14xf32>
    %58 = vector.extract_strided_slice %38 {offsets = [5, 0], sizes = [14, 14], strides = [1, 1]} : vector<20x14xf32> to vector<14x14xf32>
    %cst_14 = arith.constant 0.141167626 : f32
    %59 = vector.broadcast %cst_14 : f32 to vector<14x14xf32>
    %60 = arith.mulf %59, %58 : vector<14x14xf32>
    %61 = arith.addf %57, %60 : vector<14x14xf32>
    %62 = vector.extract_strided_slice %38 {offsets = [6, 0], sizes = [14, 14], strides = [1, 1]} : vector<20x14xf32> to vector<14x14xf32>
    %cst_15 = arith.constant 0.136004984 : f32
    %63 = vector.broadcast %cst_15 : f32 to vector<14x14xf32>
    %64 = arith.mulf %63, %62 : vector<14x14xf32>
    %65 = arith.addf %61, %64 : vector<14x14xf32>
    %c0_16 = arith.constant 0 : index
    %c0_17 = arith.constant 0 : index
    %c0_18 = arith.constant 0 : index
    %c0_19 = arith.constant 0 : index
    %66 = vector.load %arg3[%c0_16, %c0_17, %c0_18, %c0_19] : memref<1x1x14x14xf32, #tpu.memory_space<vmem>>, vector<1x1x14x14xf32>
    %67 = vector.shape_cast %66 : vector<1x1x14x14xf32> to vector<14x14xf32>
    %68 = vector.shape_cast %65 : vector<14x14xf32> to vector<1x1x14x14xf32>
    tpu.vector_store %arg3[%c0_16, %c0_17, %c0_18, %c0_19], %68 {strides = array<i32>} : memref<1x1x14x14xf32, #tpu.memory_space<vmem>>, vector<1x1x14x14xf32>,
    return
  }
  func.func @transform_0(%arg0: i32, %arg1: i32) -> (i32, i32, i32, i32) {
    %c0_i32 = arith.constant 0 : i32
    %c0_i32_0 = arith.constant 0 : i32
    %c0_i32_1 = arith.constant 0 : i32
    return %arg0, %arg1, %c0_i32, %c0_i32_0 : i32, i32, i32, i32
  }
  func.func @transform_1(%arg0: i32, %arg1: i32) -> (i32, i32, i32, i32) {
    %c0_i32 = arith.constant 0 : i32
    %c0_i32_0 = arith.constant 0 : i32
    %c0_i32_1 = arith.constant 0 : i32
    return %arg0, %arg1, %c0_i32, %c0_i32_0 : i32, i32, i32, i32
  }
}

</mosaic_0001>

<llo_original>
// kernel: tpu_custom_call.1
$region0: #{tpu_custom_call.1}
  #allocation0 [shape = 'u32[]', space=smem, size = 0x4, offset = 0x4, fixed_abs, tag = 'smem constant byte address 0x4 - core index']
  #allocation1 [shape = 'u32[144,128]{1,0:T(1,128)}', space=vmem, size = 0x12000, scoped, tag = 'internal scratch']
  %s0 = inlined_call_operand.hbm [shape: f32[2,4,16,16], index: 0, kind: input, shape index: {}]
  %s1 = inlined_call_operand.vmem [shape: f32[2,4,14,14], index: 1, kind: output, shape index: {}]
  %s2 = sld [smem:[#allocation0]]
  $region41: #{tpu_custom_call.1} parent=0
    _
  %s4 = ssub.s32 1, %s2
  %s5 = scalar_select 0, %s4, %s2
  $region1: #{tpu_custom_call.1} parent=0
    #allocation2 [shape = 'u8[16384]{0}', space=vmem, size = 0x4000, scoped, tag = 'input window, operand 0']
    #allocation3 [shape = 's32[2]{0}', space=sflag, size = 0x8, scoped, tag = 'scoped memory for tpu_custom_call.1']
    %6 = vsyncpa [#allocation3], 0
    %s7 = scalar_lea.sflag [#allocation3], 1
    %8 = vsyncpa %s7, 0
    loop: start=0, step=1, limit=10
    $region2: #{tpu_custom_call.1} parent=1 // loop_pre_header
      _
    $region3: #{tpu_custom_call.1} parent=1 // loop_header
      %s10 = sphi 0, %s14
      %p11 = scmp.ge.s32.totalorder %s10, 10
      %s17 = sphi 0, %s29
      %s18 = sphi 0, %s25
      %s19 = sphi 0, %s17
      %s20 = sphi 0, %s18
      %s21 = sphi 0, %s19
      %s22 = sphi 0, %s20
      %s34 = sphi 0, %s36
      %s37 = sphi 0, %s34
      %s38 = sphi 0, %s37
      %s54 = sphi 0, %s38
      %s62 = sphi 0, %s64
      %s65 = sphi 0, %s62
      %s66 = sphi 0, %s65
      %s82 = sphi 0, %s66
    $region4: #{tpu_custom_call.1} parent=1 // loop_header_branch
      %13 = sbr.rel (%p11) target = $region8
    $region5: #{tpu_custom_call.1} parent=1 // loop_body
      %s15 = ssub.s32 %s10, 1
      %s16 = ssub.s32 %s10, 2
      %s23 = sadd.s32 1, %s18
      %p24 = scmp.ge.s32.totalorder %s23, 4
      %s25 = scalar_select %p24, 0, %s23
      %s26 = sadd.s32 1, %s17
      %s27 = scalar_select %p24, %s26, %s17
      %p28 = scmp.ge.s32.totalorder %s27, 2
      %s29 = scalar_select %p28, 0, %s27
      %s30 = ssub.s32 %s17, %s29
      %s31 = ssub.s32 %s18, %s25
      %s32 = sor.u32 %s30, %s31
      %p33 = scmp.eq.s32.totalorder %s32, 0
      %s35 = sadd.s32 %s34, 1
      %s36 = scalar_select %p33, %s34, %s35
      %p39 = pneg %p33
      %p40 = scmp.eq.s32.totalorder %s10, 7
      %p41 = por %p39, %p40
      %p42 = scmp.ne.s32.totalorder %s34, %s37
      %p43 = scmp.eq.s32.totalorder %s10, 0
      %p44 = por %p42, %p43
      %p45 = scmp.ne.s32.totalorder %s34, %s37
      %p46 = scmp.eq.s32.totalorder %s15, 7
      %p47 = por %p45, %p46
      %p48 = scmp.ne.s32.totalorder %s37, %s38
      %p49 = scmp.eq.s32.totalorder %s15, 0
      %p50 = por %p48, %p49
      %p51 = scmp.ne.s32.totalorder %s37, %s38
      %p52 = scmp.eq.s32.totalorder %s16, 7
      %p53 = por %p51, %p52
      %p55 = scmp.ne.s32.totalorder %s38, %s54
      %p56 = scmp.eq.s32.totalorder %s16, 0
      %p57 = por %p55, %p56
      %s58 = ssub.s32 %s17, %s29
      %s59 = ssub.s32 %s18, %s25
      %s60 = sor.u32 %s58, %s59
      %p61 = scmp.eq.s32.totalorder %s60, 0
      %s63 = sadd.s32 %s62, 1
      %s64 = scalar_select %p61, %s62, %s63
      %p67 = pneg %p61
      %p68 = scmp.eq.s32.totalorder %s10, 7
      %p69 = por %p67, %p68
      %p70 = scmp.ne.s32.totalorder %s62, %s65
      %p71 = scmp.eq.s32.totalorder %s10, 0
      %p72 = por %p70, %p71
      %p73 = scmp.ne.s32.totalorder %s62, %s65
      %p74 = scmp.eq.s32.totalorder %s15, 7
      %p75 = por %p73, %p74
      %p76 = scmp.ne.s32.totalorder %s65, %s66
      %p77 = scmp.eq.s32.totalorder %s15, 0
      %p78 = por %p76, %p77
      %p79 = scmp.ne.s32.totalorder %s65, %s66
      %p80 = scmp.eq.s32.totalorder %s16, 7
      %p81 = por %p79, %p80
      %p83 = scmp.ne.s32.totalorder %s66, %s82
      %p84 = scmp.eq.s32.totalorder %s16, 0
      %p85 = por %p83, %p84
      %p86 = scmp.le.s32.totalorder 1, %s10
      %p87 = scmp.lt.s32.totalorder %s10, 9
      %p88 = pnand %p86, %p87
      %p89 = pneg %p88
      // Predicated region
      $region9: #{tpu_custom_call.1} parent=5 // pred_check
        _
      $region10: #{tpu_custom_call.1} parent=5 // pred_check_branch
        %91 = sbr.rel (%p88) target = $region12
      $region11: #{tpu_custom_call.1} parent=5 // pred_region
        %s92 = ssub.s32 %s10, 1
      $region12: #{tpu_custom_call.1} parent=5 // pred_fallthru
        _
      %p93 = scmp.lt.s32.totalorder %s10, 8
      // Predicated region
      $region13: #{tpu_custom_call.1} parent=5 // pred_check
        %p94 = pneg %p93
      $region14: #{tpu_custom_call.1} parent=5 // pred_check_branch
        %96 = sbr.rel (%p94) target = $region16
      $region15: #{tpu_custom_call.1} parent=5 // pred_region
        // Predicated region
        $region17: #{tpu_custom_call.1} parent=15 // pred_check
          %p97 = pneg %p44
        $region18: #{tpu_custom_call.1} parent=15 // pred_check_branch
          %99 = sbr.rel (%p97) target = $region20
        $region19: #{tpu_custom_call.1} parent=15 // pred_region
          %s100 = sand.u32 %s34, 1
          %s101 = scalar_lea.sflag [#allocation3], %s100
          %s102 = sand.u32 %s34, 1
          %s103 = smul.addr %s102, 16
          %s104 = scalar_lea.vmem [#allocation2], %s103
          %s106 = ssub.s32 256, 256
          %107 = vsyncadd %s101, %s106
          %s108 = smul.addr %s18, 2
          %s109 = smul.addr %s17, 8
          %s110 = sadd.s32 %s108, %s109
          %s111 = smul.addr %s110, 128
          %s112 = scalar_lea.hbm %s0, %s111
          %s113 = sshll.u32 %s104, 4
          %s114 = int_to_ptr.vmem [resolvable:$true] %s113
          %119 = dma.hbm_to_vmem [thread:$0]  %s112, 256, %s114, %s101, 128, 128, 8
        $region20: #{tpu_custom_call.1} parent=15 // pred_fallthru
          _
      $region16: #{tpu_custom_call.1} parent=5 // pred_fallthru
        _
      %p120 = scmp.le.s32.totalorder 1, %s10
      %p121 = scmp.lt.s32.totalorder %s10, 9
      %p122 = pnand %p120, %p121
      %p123 = pneg %p122
      // Predicated region
      $region21: #{tpu_custom_call.1} parent=5 // pred_check
        _
      $region22: #{tpu_custom_call.1} parent=5 // pred_check_branch
        %125 = sbr.rel (%p122) target = $region24
      $region23: #{tpu_custom_call.1} parent=5 // pred_region
        %s126 = ssub.s32 %s10, 1
        %s127 = sand.u32 %s37, 1
        %s128 = scalar_lea.sflag [#allocation3], %s127
        %s129 = sand.u32 %s37, 1
        %s130 = smul.addr %s129, 16
        %s131 = scalar_lea.vmem [#allocation2], %s130
        // Predicated region
        $region25: #{tpu_custom_call.1} parent=23 // pred_check
          %p132 = pneg %p50
        $region26: #{tpu_custom_call.1} parent=23 // pred_check_branch
          %134 = sbr.rel (%p132) target = $region28
        $region27: #{tpu_custom_call.1} parent=23 // pred_region
          %135 = dma.done %s128, 256
        $region28: #{tpu_custom_call.1} parent=23 // pred_fallthru
          _
        %s136 = sand.u32 %s37, 1
        %s137 = scalar_lea.sflag [#allocation3], %s136
        %s138 = sand.u32 %s37, 1
        %s139 = smul.addr %s138, 16
        %s140 = scalar_lea.vmem [#allocation2], %s139
        %p141 = pneg %p50
        %p142 = pneg %p47
        %p143 = pneg %p78
        %p144 = pneg %p75
        %p145 = scmp.lt.s32.totalorder %s19, 1
        %s146 = scalar_select %p145, %s19, 1
        %p147 = scmp.lt.s32.totalorder %s20, 3
        %s148 = scalar_select %p147, %s20, 3
        %s149 = smul.addr %s148, 2
        %s150 = smul.addr %s146, 8
        %s151 = sadd.s32 %s149, %s150
        %s152 = smul.addr %s151, 8
        %s153 = scalar_lea.vmem %s1, %s152
        %p154 = scmp.lt.s32.totalorder %s19, 1
        %s155 = scalar_select %p154, %s19, 1
        %p156 = scmp.lt.s32.totalorder %s20, 3
        %s157 = scalar_select %p156, %s20, 3
        %s158 = smul.addr %s157, 2
        %s159 = smul.addr %s155, 8
        %s160 = sadd.s32 %s158, %s159
        %s161 = smul.addr %s160, 8
        %s162 = scalar_lea.vmem %s1, %s161
        %v163 = vld [vmem:[%s131] sm:$0xff]
        %v164 = vld [vmem:[%s131 + $0x8] sm:$0xff]
        %167 = vrot.lane.b32.xlu0 %v163, 126
        %v168 = vpop.permute.xlu0 %167
        %169 = vrot.lane.b32.xlu0 %v164, 126
        %v170 = vpop.permute.xlu0 %169
        %173 = vrot.lane.b32.xlu0 %v163, 2
        %v174 = vpop.permute.xlu0 %173
        %175 = vrot.lane.b32.xlu0 %v164, 2
        %v176 = vpop.permute.xlu0 %175
        %179 = vrot.lane.b32.xlu0 %v163, 4
        %v180 = vpop.permute.xlu0 %179
        %181 = vrot.lane.b32.xlu0 %v164, 4
        %v182 = vpop.permute.xlu0 %181
        %185 = vrot.lane.b32.xlu0 %v163, 6
        %v186 = vpop.permute.xlu0 %185
        %187 = vrot.lane.b32.xlu0 %v164, 6
        %v188 = vpop.permute.xlu0 %187
        %vm191 = vcmask 7168
        %v192 = vsel %vm191, %v168, %v163
        %v193 = vsel %vm191, %v170, %v164
        %vm194 = vcmask 15360
        %v195 = vsel %vm194, %v192, %v174
        %v196 = vsel %vm194, %v193, %v176
        %vm197 = vcmask 146432
        %v198 = vsel %vm197, %v195, %v180
        %v199 = vsel %vm197, %v196, %v182
        %vm200 = vcmask 154624
        %v201 = vsel %vm200, %v198, %v186
        %v202 = vsel %vm200, %v199, %v188
        %v203 = vmul.f32 %v201, 0.13600498
        %v204 = vmul.f32 %v202, 0.13600498
        %v205 = vmul.f32 %v201, 0.14116763
        %v206 = vmul.f32 %v202, 0.14116763
        %209 = vrot.lane.b32.xlu0 %v205, 127
        %v210 = vpop.permute.xlu0 %209
        %211 = vrot.lane.b32.xlu0 %v206, 127
        %v212 = vpop.permute.xlu0 %211
        %v215 = vadd.f32 %v203, %v210
        %v216 = vadd.f32 %v204, %v212
        %v217 = vmul.f32 %v201, 0.14759426
        %v218 = vmul.f32 %v202, 0.14759426
        %221 = vrot.lane.b32.xlu0 %v217, 126
        %v222 = vpop.permute.xlu0 %221
        %223 = vrot.lane.b32.xlu0 %v218, 126
        %v224 = vpop.permute.xlu0 %223
        %v227 = vadd.f32 %v215, %v222
        %v228 = vadd.f32 %v216, %v224
        %v229 = vmul.f32 %v201, 0.1504663
        %v230 = vmul.f32 %v202, 0.1504663
        %233 = vrot.lane.b32.xlu0 %v229, 125
        %v234 = vpop.permute.xlu0 %233
        %235 = vrot.lane.b32.xlu0 %v230, 125
        %v236 = vpop.permute.xlu0 %235
        %v239 = vadd.f32 %v227, %v234
        %v240 = vadd.f32 %v228, %v236
        %241 = vrot.lane.b32.xlu0 %v217, 124
        %v242 = vpop.permute.xlu0 %241
        %243 = vrot.lane.b32.xlu0 %v218, 124
        %v244 = vpop.permute.xlu0 %243
        %v247 = vadd.f32 %v239, %v242
        %v248 = vadd.f32 %v240, %v244
        %249 = vrot.lane.b32.xlu0 %v205, 123
        %v250 = vpop.permute.xlu0 %249
        %251 = vrot.lane.b32.xlu0 %v206, 123
        %v252 = vpop.permute.xlu0 %251
        %v255 = vadd.f32 %v247, %v250
        %v256 = vadd.f32 %v248, %v252
        %259 = vrot.lane.b32.xlu0 %v203, 122
        %v260 = vpop.permute.xlu0 %259
        %261 = vrot.lane.b32.xlu0 %v204, 122
        %v262 = vpop.permute.xlu0 %261
        %v265 = vadd.f32 %v255, %v260
        %v266 = vadd.f32 %v256, %v262
        %v268 = vrot.slane %v265, 2
        %vm271 = vcmask 1041408
        %v272 = vrot.slane %v265, 6
        %v273 = vrot.slane %v266, 6
        %v274 = vsel %vm271, %v272, %v273
        %v278 = vrot.slane %v266, 4
        %v280 = vrot.slane %v266, 2
        %vm282 = vcmask 1040384
        %v283 = vsel %vm282, %v268, %v265
        %v284 = vsel %vm271, %v283, %v272
        %v285 = vsel %vm271, %v273, %v278
        %vm286 = vcmask 1042432
        %v287 = vsel %vm286, %v285, %v280
        %v288 = vmul.f32 %v284, 0.13600498
        %v289 = vmul.f32 %v274, 0.13600498
        %v290 = vmul.f32 %v284, 0.14116763
        %v291 = vmul.f32 %v274, 0.14116763
        %vm294 = vcmask 1046528
        %v295 = vrot.slane %v290, 1
        %v296 = vrot.slane %v291, 1
        %v297 = vsel %vm294, %v295, %v296
        %v300 = vadd.f32 %v288, %v297
        %v301 = vadd.f32 %v289, %v296
        %v302 = vmul.f32 %v284, 0.14759426
        %v303 = vmul.f32 %v274, 0.14759426
        %vm306 = vcmask 1045504
        %v307 = vrot.slane %v302, 2
        %v308 = vrot.slane %v303, 2
        %v309 = vsel %vm306, %v307, %v308
        %v312 = vadd.f32 %v300, %v309
        %v313 = vadd.f32 %v301, %v308
        %v314 = vmul.f32 %v284, 0.1504663
        %v315 = vmul.f32 %v274, 0.1504663
        %v316 = vmul.f32 %v287, 0.1504663
        %vm320 = vcmask 1044480
        %v321 = vrot.slane %v314, 3
        %v322 = vrot.slane %v315, 3
        %v323 = vsel %vm320, %v321, %v322
        %v324 = vrot.slane %v316, 3
        %v325 = vsel %vm320, %v322, %v324
        %v328 = vadd.f32 %v312, %v323
        %v329 = vadd.f32 %v313, %v325
        %v330 = vmul.f32 %v287, 0.14759426
        %vm332 = vcmask 1043456
        %v333 = vrot.slane %v302, 4
        %v334 = vrot.slane %v303, 4
        %v335 = vsel %vm332, %v333, %v334
        %v336 = vrot.slane %v330, 4
        %v337 = vsel %vm332, %v334, %v336
        %v340 = vadd.f32 %v328, %v335
        %v341 = vadd.f32 %v329, %v337
        %v342 = vmul.f32 %v287, 0.14116763
        %v344 = vrot.slane %v290, 5
        %v345 = vrot.slane %v291, 5
        %v346 = vsel %vm286, %v344, %v345
        %v347 = vrot.slane %v342, 5
        %v348 = vsel %vm286, %v345, %v347
        %v351 = vadd.f32 %v340, %v346
        %v352 = vadd.f32 %v341, %v348
        %v353 = vmul.f32 %v287, 0.13600498
        %v357 = vrot.slane %v288, 6
        %v358 = vrot.slane %v289, 6
        %v359 = vsel %vm271, %v357, %v358
        %v360 = vrot.slane %v353, 6
        %v361 = vsel %vm271, %v358, %v360
        %v364 = vadd.f32 %v351, %v359
        %v365 = vadd.f32 %v352, %v361
        %vm366 = vcmask 113664
        %367 = vst.msk [vmem:[%s162] sm:$0xff] %vm366, %v364
        %vm368 = vcmask 111616
        %369 = vst.msk [vmem:[%s162 + $0x8] sm:$0x3f] %vm368, %v365
        %p370 = scmp.lt.s32.totalorder %s19, 1
        %s371 = scalar_select %p370, %s19, 1
        %p372 = scmp.lt.s32.totalorder %s20, 3
        %s373 = scalar_select %p372, %s20, 3
        %s374 = smul.addr %s373, 2
        %s375 = smul.addr %s371, 8
        %s376 = sadd.s32 %s374, %s375
        %s377 = smul.addr %s376, 8
        %s378 = scalar_lea.vmem %s1, %s377
        // Predicated region
        $region29: #{tpu_custom_call.1} parent=23 // pred_check
          %p379 = pneg %p75
        $region30: #{tpu_custom_call.1} parent=23 // pred_check_branch
          %381 = sbr.rel (%p379) target = $region32
        $region31: #{tpu_custom_call.1} parent=23 // pred_region
          _
        $region32: #{tpu_custom_call.1} parent=23 // pred_fallthru
          _
      $region24: #{tpu_custom_call.1} parent=5 // pred_fallthru
        _
      %p382 = scmp.le.s32.totalorder 2, %s10
      // Predicated region
      $region33: #{tpu_custom_call.1} parent=5 // pred_check
        %p383 = pneg %p382
      $region34: #{tpu_custom_call.1} parent=5 // pred_check_branch
        %385 = sbr.rel (%p383) target = $region36
      $region35: #{tpu_custom_call.1} parent=5 // pred_region
        %s386 = ssub.s32 %s10, 2
        // Predicated region
        $region37: #{tpu_custom_call.1} parent=35 // pred_check
          %p387 = pneg %p81
        $region38: #{tpu_custom_call.1} parent=35 // pred_check_branch
          %389 = sbr.rel (%p387) target = $region40
        $region39: #{tpu_custom_call.1} parent=35 // pred_region
          %p390 = scmp.lt.s32.totalorder %s21, 1
          %s391 = scalar_select %p390, %s21, 1
          %p392 = scmp.lt.s32.totalorder %s22, 3
          %s393 = scalar_select %p392, %s22, 3
          %s394 = smul.addr %s393, 2
          %s395 = smul.addr %s391, 8
          %s396 = sadd.s32 %s394, %s395
          %s397 = smul.addr %s396, 8
          %s398 = scalar_lea.vmem %s1, %s397
        $region40: #{tpu_custom_call.1} parent=35 // pred_fallthru
          _
      $region36: #{tpu_custom_call.1} parent=5 // pred_fallthru
        _
    $region6: #{tpu_custom_call.1} parent=1 // loop_footer
      %s14 = sadd.s32 1, %s10
    $region7: #{tpu_custom_call.1} parent=1 // loop_footer_branch
      %9 = sbr.rel target = $region3
    $region8: #{tpu_custom_call.1} parent=1 // loop_exit
      _
    %399 = vsyncpa [#allocation3], 1
    %s400 = scalar_lea.sflag [#allocation3], 1
    %401 = vsyncpa %s400, 1

</llo_original>
